<compile_context>
chip_gen: v7x
topology: tpu7x:2x2x1
jax: 0.10.0
libtpu: 0.0.40
codegen_flags: <defaults>
</compile_context>

<pallas_src>
import functools

import jax
import jax.numpy as jnp
from jax.experimental import pallas as pl
from jax.experimental.pallas import tpu as pltpu


_LANES = 128      # vreg lane width; lane-dense packed layout
_SUBLANES = 8     # f32 sublane tile


def _cdiv(a, b):
    return -(-a // b)


def _round_up(x, m):
    return _cdiv(x, m) * m


def _kldiv_kernel(mu_ref, logvar_ref, out_ref, *, scale, tile_rows):
    """Accumulate sum(1 + logvar - mu^2 - exp(logvar)) over grid axis 1.

    out_ref is an (8, 128) f32 block resident across the reduction axis; it is
    used directly as the partial-sum accumulator (P3 pattern). `scale`
    (= -0.5 * beta / denom) is applied once at the last reduction step.
    """
    i = pl.program_id(1)

    @pl.when(i == 0)
    def _init():
        out_ref[...] = jnp.zeros_like(out_ref)

    mu = mu_ref[...].astype(jnp.float32)
    lv = logvar_ref[...].astype(jnp.float32)
    term = 1.0 + lv - mu * mu - jnp.exp(lv)

    # Fold the (tile_rows, 128) tile into the vreg-shaped (8, 128) accumulator
    # with plain vector adds; the expensive cross-lane reduction is deferred
    # to the wrapper (done once on num_splits * 1024 elements).
    out_ref[...] += jnp.sum(
        term.reshape(tile_rows // _SUBLANES, _SUBLANES, _LANES), axis=0)

    @pl.when(i == pl.num_programs(1) - 1)
    def _finalize():
        out_ref[...] = out_ref[...] * scale


def _reference(mu, logvar, *, beta=1.0, reduction="mean"):
    mu32 = mu.astype(jnp.float32)
    lv32 = logvar.astype(jnp.float32)
    kl = -0.5 * jnp.sum(1.0 + lv32 - jnp.square(mu32) - jnp.exp(lv32))
    if reduction == "mean":
        kl = kl / mu.size
    return beta * kl


def beta_vae_kldiv(mu, logvar, *, beta=1.0, reduction="mean",
                   tile_rows=2048, num_splits=2, use_pallas=None):
    """Pallas TPU implementation of BetaVAE_KLDiv.forward."""
    assert mu.shape == logvar.shape
    n = int(mu.size)
    if use_pallas is None:
        # Tiny inputs: dispatch + per-step overhead dominates; fused XLA wins.
        use_pallas = n >= (1 << 16)
    if not use_pallas:
        return _reference(mu, logvar, beta=beta, reduction=reduction)

    denom = float(n) if reduction == "mean" else 1.0
    scale = -0.5 * float(beta) / denom

    # ---- lane-dense packing: flat -> (rows_padded, 128) ------------------
    rows = _cdiv(n, _LANES)
    # rows handled by each parallel split, padded to the sublane tile
    r_split = _round_up(_cdiv(rows, num_splits), _SUBLANES)
    steps = _cdiv(r_split, max(tile_rows, _SUBLANES))
    tm = _round_up(_cdiv(r_split, steps), _SUBLANES)   # rows per grid step
    r_split = steps * tm
    rows_padded = num_splits * r_split

    pad = rows_padded * _LANES - n
    mu_flat = jnp.ravel(mu)
    lv_flat = jnp.ravel(logvar)
    if pad:
        # Zero padding contributes exactly 0 to the KL sum.
        mu_flat = jnp.pad(mu_flat, (0, pad))
        lv_flat = jnp.pad(lv_flat, (0, pad))
    mu2d = mu_flat.reshape(rows_padded, _LANES)
    lv2d = lv_flat.reshape(rows_padded, _LANES)

    kernel = functools.partial(_kldiv_kernel, scale=scale, tile_rows=tm)

    in_spec = pl.BlockSpec((tm, _LANES), lambda p, i: (p * steps + i, 0))
    out_spec = pl.BlockSpec((_SUBLANES, _LANES), lambda p, i: (p, 0))

    partials = pl.pallas_call(
        kernel,
        out_shape=jax.ShapeDtypeStruct((num_splits * _SUBLANES, _LANES),
                                       jnp.float32),
        grid=(num_splits, steps),
        in_specs=[in_spec, in_spec],
        out_specs=out_spec,
        compiler_params=pltpu.CompilerParams(
            dimension_semantics=("parallel", "arbitrary"),
            vmem_limit_bytes=32 * 1024 * 1024,
        ),
    )(mu2d, lv2d)

    # Final tiny cross-lane reduction (num_splits * 8 * 128 elems), fused XLA.
    return jnp.sum(partials)


if __name__ == "__main__":
    key = jax.random.PRNGKey(0)
    k1, k2, k3, k4 = jax.random.split(key, 4)

    # Case 1: canonical small beta-VAE latent params (batch=2, latent=32).
    # Force the Pallas path (the size heuristic would otherwise use fused XLA).
    mu1 = jax.random.normal(k1, (2, 32), dtype=jnp.float32)
    lv1 = jax.random.normal(k2, (2, 32), dtype=jnp.float32) * 0.5
    out1 = beta_vae_kldiv(mu1, lv1, beta=4.0, reduction="mean",
                          use_pallas=True)
    out1 = jax.block_until_ready(out1)
    ref1 = _reference(mu1, lv1, beta=4.0, reduction="mean")
    assert jnp.allclose(out1, ref1, rtol=1e-5, atol=1e-5), (out1, ref1)

    # Case 2: odd shape -> exercises padding + multi-step accumulation across
    # the reduction grid (small tile_rows on purpose), with 'sum' reduction.
    mu2 = jax.random.normal(k3, (128, 257), dtype=jnp.float32)
    lv2 = jax.random.normal(k4, (128, 257), dtype=jnp.float32) * 0.3
    out2 = beta_vae_kldiv(mu2, lv2, beta=0.5, reduction="sum",
                          tile_rows=16, use_pallas=True)
    out2 = jax.block_until_ready(out2)
    ref2 = _reference(mu2, lv2, beta=0.5, reduction="sum")
    assert jnp.allclose(out2, ref2, rtol=1e-4, atol=1e-3), (out2, ref2)

    # Case 3: tiny-input fast path (pure fused XLA, no kernel launch).
    out3 = beta_vae_kldiv(mu1, lv1, beta=1.0, reduction="mean")
    out3 = jax.block_until_ready(out3)
    ref3 = _reference(mu1, lv1, beta=1.0, reduction="mean")
    assert jnp.allclose(out3, ref3, rtol=1e-5, atol=1e-5), (out3, ref3)

    print("KERNEL_OK")
</pallas_src>

<mosaic_0001>
module attributes {stable_mosaic.version = 11 : i64} {
  func.func @_kldiv_kernel(%arg0: i32, %arg1: i32, %arg2: memref<8x128xf32, #tpu.memory_space<vmem>>, %arg3: memref<8x128xf32, #tpu.memory_space<vmem>>, %arg4: memref<8x128xf32, #tpu.memory_space<vmem>>) attributes {dimension_semantics = [#tpu.dimension_semantics<parallel>, #tpu.dimension_semantics<arbitrary>], iteration_bounds = array<i64: 2, 1>, scalar_prefetch = 0 : i64, scratch_operands = 0 : i64, tpu.core_type = #tpu.core_type<tc>, window_params = [{transform_indices = @transform_0, window_bounds = array<i64: 8, 128>}, {transform_indices = @transform_1, window_bounds = array<i64: 8, 128>}, {transform_indices = @transform_2, window_bounds = array<i64: 8, 128>}]} {
    %c0_i32 = arith.constant 0 : i32
    %0 = arith.cmpi eq, %arg1, %c0_i32 : i32
    %1 = arith.extui %0 : i1 to i32
    %c0_i32_0 = arith.constant 0 : i32
    %2 = arith.cmpi ne, %1, %c0_i32_0 : i32
    scf.if %2 {
      %cst_11 = arith.constant 0.000000e+00 : f32
      %19 = vector.broadcast %cst_11 : f32 to vector<8x128xf32>
      %c0_12 = arith.constant 0 : index
      %c0_13 = arith.constant 0 : index
      %20 = vector.load %arg4[%c0_12, %c0_13] : memref<8x128xf32, #tpu.memory_space<vmem>>, vector<8x128xf32>
      tpu.vector_store %arg4[%c0_12, %c0_13], %19 {strides = array<i32>} : memref<8x128xf32, #tpu.memory_space<vmem>>, vector<8x128xf32>,
    } else {
    }
    %c0 = arith.constant 0 : index
    %c0_1 = arith.constant 0 : index
    %3 = vector.load %arg2[%c0, %c0_1] : memref<8x128xf32, #tpu.memory_space<vmem>>, vector<8x128xf32>
    %c0_2 = arith.constant 0 : index
    %c0_3 = arith.constant 0 : index
    %4 = vector.load %arg3[%c0_2, %c0_3] : memref<8x128xf32, #tpu.memory_space<vmem>>, vector<8x128xf32>
    %cst = arith.constant 1.000000e+00 : f32
    %5 = vector.broadcast %cst : f32 to vector<8x128xf32>
    %6 = arith.addf %5, %4 : vector<8x128xf32>
    %7 = arith.mulf %3, %3 : vector<8x128xf32>
    %8 = arith.subf %6, %7 : vector<8x128xf32>
    %9 = math.exp %4 : vector<8x128xf32>
    %10 = arith.subf %8, %9 : vector<8x128xf32>
    %c0_4 = arith.constant 0 : index
    %c0_5 = arith.constant 0 : index
    %11 = vector.load %arg4[%c0_4, %c0_5] : memref<8x128xf32, #tpu.memory_space<vmem>>, vector<8x128xf32>
    %12 = vector.shape_cast %10 : vector<8x128xf32> to vector<1x8x128xf32>
    %cst_6 = arith.constant dense<0.000000e+00> : vector<8x128xf32>
    %13 = vector.multi_reduction <add>, %12, %cst_6 [0] : vector<1x8x128xf32> to vector<8x128xf32>
    %14 = arith.addf %11, %13 : vector<8x128xf32>
    %c0_7 = arith.constant 0 : index
    %c0_8 = arith.constant 0 : index
    %15 = vector.load %arg4[%c0_7, %c0_8] : memref<8x128xf32, #tpu.memory_space<vmem>>, vector<8x128xf32>
    tpu.vector_store %arg4[%c0_7, %c0_8], %14 {strides = array<i32>} : memref<8x128xf32, #tpu.memory_space<vmem>>, vector<8x128xf32>,
    %c0_i32_9 = arith.constant 0 : i32
    %16 = arith.cmpi eq, %arg1, %c0_i32_9 : i32
    %17 = arith.extui %16 : i1 to i32
    %c0_i32_10 = arith.constant 0 : i32
    %18 = arith.cmpi ne, %17, %c0_i32_10 : i32
    scf.if %18 {
      %c0_11 = arith.constant 0 : index
      %c0_12 = arith.constant 0 : index
      %19 = vector.load %arg4[%c0_11, %c0_12] : memref<8x128xf32, #tpu.memory_space<vmem>>, vector<8x128xf32>
      %cst_13 = arith.constant -3.125000e-02 : f32
      %20 = vector.broadcast %cst_13 : f32 to vector<8x128xf32>
      %21 = arith.mulf %19, %20 : vector<8x128xf32>
      %c0_14 = arith.constant 0 : index
      %c0_15 = arith.constant 0 : index
      %22 = vector.load %arg4[%c0_14, %c0_15] : memref<8x128xf32, #tpu.memory_space<vmem>>, vector<8x128xf32>
      tpu.vector_store %arg4[%c0_14, %c0_15], %21 {strides = array<i32>} : memref<8x128xf32, #tpu.memory_space<vmem>>, vector<8x128xf32>,
    } else {
    }
    return
  }
  func.func @transform_0(%arg0: i32, %arg1: i32) -> (i32, i32) {
    %c1_i32 = arith.constant 1 : i32
    %0 = arith.muli %arg0, %c1_i32 : i32
    %1 = arith.addi %0, %arg1 : i32
    %c0_i32 = arith.constant 0 : i32
    %c0_i32_0 = arith.constant 0 : i32
    return %1, %c0_i32 : i32, i32
  }
  func.func @transform_1(%arg0: i32, %arg1: i32) -> (i32, i32) {
    %c1_i32 = arith.constant 1 : i32
    %0 = arith.muli %arg0, %c1_i32 : i32
    %1 = arith.addi %0, %arg1 : i32
    %c0_i32 = arith.constant 0 : i32
    %c0_i32_0 = arith.constant 0 : i32
    return %1, %c0_i32 : i32, i32
  }
  func.func @transform_2(%arg0: i32, %arg1: i32) -> (i32, i32) {
    %c0_i32 = arith.constant 0 : i32
    %c0_i32_0 = arith.constant 0 : i32
    return %arg0, %c0_i32 : i32, i32
  }
}

</mosaic_0001>

<llo_original>
// kernel: tpu_custom_call.1
$region0: #{tpu_custom_call.1}
  #allocation0 [shape = 'u32[]', space=smem, size = 0x4, offset = 0x4, fixed_abs, tag = 'smem constant byte address 0x4 - core index']
  #allocation1 [shape = 'u32[144,128]{1,0:T(1,128)}', space=vmem, size = 0x12000, scoped, tag = 'internal scratch']
  %s0 = inlined_call_operand.hbm [shape: f32[16,128], index: 0, kind: input, shape index: {}]
  %s1 = inlined_call_operand.hbm [shape: f32[16,128], index: 1, kind: input, shape index: {}]
  %s2 = inlined_call_operand.hbm [shape: f32[16,128], index: 2, kind: output, shape index: {}]
  %s3 = sld [smem:[#allocation0]]
  $region57: #{tpu_custom_call.1} parent=0
    _
  %s5 = ssub.s32 1, %s3
  %s6 = scalar_select 0, %s5, %s3
  $region1: #{tpu_custom_call.1} parent=0
    #allocation2 [shape = 'u8[8192]{0}', space=vmem, size = 0x2000, scoped, tag = 'input window, operand 0']
    #allocation3 [shape = 's32[2]{0}', space=sflag, size = 0x8, scoped, tag = 'scoped memory for tpu_custom_call.1']
    #allocation4 [shape = 's32[2]{0}', space=sflag, size = 0x8, scoped, tag = 'scoped memory for tpu_custom_call.1']
    #allocation5 [shape = 'u8[8192]{0}', space=vmem, size = 0x2000, scoped, tag = 'input window, operand 1']
    #allocation6 [shape = 's32[2]{0}', space=sflag, size = 0x8, scoped, tag = 'scoped memory for tpu_custom_call.1']
    #allocation7 [shape = 'u8[8192]{0}', space=vmem, size = 0x2000, scoped, tag = 'output window, operand 0']
    %7 = vsyncpa [#allocation3], 0
    %s8 = scalar_lea.sflag [#allocation3], 1
    %9 = vsyncpa %s8, 0
    %10 = vsyncpa [#allocation6], 0
    %s11 = scalar_lea.sflag [#allocation6], 1
    %12 = vsyncpa %s11, 0
    %13 = vsyncpa [#allocation4], 0
    %s14 = scalar_lea.sflag [#allocation4], 1
    %15 = vsyncpa %s14, 0
    loop: start=0, step=1, limit=4
    $region2: #{tpu_custom_call.1} parent=1 // loop_pre_header
      _
    $region3: #{tpu_custom_call.1} parent=1 // loop_header
      %s17 = sphi 0, %s21
      %p18 = scmp.ge.s32.totalorder %s17, 4
      %s24 = sphi 0, %s36
      %s25 = sphi 0, %s32
      %s26 = sphi 0, %s24
      %s27 = sphi 0, %s25
      %s28 = sphi 0, %s26
      %s29 = sphi 0, %s27
      %s41 = sphi 0, %s43
      %s44 = sphi 0, %s41
      %s45 = sphi 0, %s44
      %s61 = sphi 0, %s45
      %s69 = sphi 0, %s71
      %s72 = sphi 0, %s69
      %s73 = sphi 0, %s72
      %s89 = sphi 0, %s73
      %s95 = sphi 0, %s97
      %s98 = sphi 0, %s95
      %s99 = sphi 0, %s98
      %s115 = sphi 0, %s99
    $region4: #{tpu_custom_call.1} parent=1 // loop_header_branch
      %20 = sbr.rel (%p18) target = $region8
    $region5: #{tpu_custom_call.1} parent=1 // loop_body
      %s22 = ssub.s32 %s17, 1
      %s23 = ssub.s32 %s17, 2
      %s30 = sadd.s32 1, %s25
      %p31 = scmp.ge.s32.totalorder %s30, 1
      %s32 = scalar_select %p31, 0, %s30
      %s33 = sadd.s32 1, %s24
      %s34 = scalar_select %p31, %s33, %s24
      %p35 = scmp.ge.s32.totalorder %s34, 2
      %s36 = scalar_select %p35, 0, %s34
      %s37 = sadd.s32 %s24, %s25
      %s38 = sadd.s32 %s36, %s32
      %s39 = ssub.s32 %s37, %s38
      %p40 = scmp.eq.s32.totalorder %s39, 0
      %s42 = sadd.s32 %s41, 1
      %s43 = scalar_select %p40, %s41, %s42
      %p46 = pneg %p40
      %p47 = scmp.eq.s32.totalorder %s17, 1
      %p48 = por %p46, %p47
      %p49 = scmp.ne.s32.totalorder %s41, %s44
      %p50 = scmp.eq.s32.totalorder %s17, 0
      %p51 = por %p49, %p50
      %p52 = scmp.ne.s32.totalorder %s41, %s44
      %p53 = scmp.eq.s32.totalorder %s22, 1
      %p54 = por %p52, %p53
      %p55 = scmp.ne.s32.totalorder %s44, %s45
      %p56 = scmp.eq.s32.totalorder %s22, 0
      %p57 = por %p55, %p56
      %p58 = scmp.ne.s32.totalorder %s44, %s45
      %p59 = scmp.eq.s32.totalorder %s23, 1
      %p60 = por %p58, %p59
      %p62 = scmp.ne.s32.totalorder %s45, %s61
      %p63 = scmp.eq.s32.totalorder %s23, 0
      %p64 = por %p62, %p63
      %s65 = sadd.s32 %s24, %s25
      %s66 = sadd.s32 %s36, %s32
      %s67 = ssub.s32 %s65, %s66
      %p68 = scmp.eq.s32.totalorder %s67, 0
      %s70 = sadd.s32 %s69, 1
      %s71 = scalar_select %p68, %s69, %s70
      %p74 = pneg %p68
      %p75 = scmp.eq.s32.totalorder %s17, 1
      %p76 = por %p74, %p75
      %p77 = scmp.ne.s32.totalorder %s69, %s72
      %p78 = scmp.eq.s32.totalorder %s17, 0
      %p79 = por %p77, %p78
      %p80 = scmp.ne.s32.totalorder %s69, %s72
      %p81 = scmp.eq.s32.totalorder %s22, 1
      %p82 = por %p80, %p81
      %p83 = scmp.ne.s32.totalorder %s72, %s73
      %p84 = scmp.eq.s32.totalorder %s22, 0
      %p85 = por %p83, %p84
      %p86 = scmp.ne.s32.totalorder %s72, %s73
      %p87 = scmp.eq.s32.totalorder %s23, 1
      %p88 = por %p86, %p87
      %p90 = scmp.ne.s32.totalorder %s73, %s89
      %p91 = scmp.eq.s32.totalorder %s23, 0
      %p92 = por %p90, %p91
      %s93 = ssub.s32 %s24, %s36
      %p94 = scmp.eq.s32.totalorder %s93, 0
      %s96 = sadd.s32 %s95, 1
      %s97 = scalar_select %p94, %s95, %s96
      %p100 = pneg %p94
      %p101 = scmp.eq.s32.totalorder %s17, 1
      %p102 = por %p100, %p101
      %p103 = scmp.ne.s32.totalorder %s95, %s98
      %p104 = scmp.eq.s32.totalorder %s17, 0
      %p105 = por %p103, %p104
      %p106 = scmp.ne.s32.totalorder %s95, %s98
      %p107 = scmp.eq.s32.totalorder %s22, 1
      %p108 = por %p106, %p107
      %p109 = scmp.ne.s32.totalorder %s98, %s99
      %p110 = scmp.eq.s32.totalorder %s22, 0
      %p111 = por %p109, %p110
      %p112 = scmp.ne.s32.totalorder %s98, %s99
      %p113 = scmp.eq.s32.totalorder %s23, 1
      %p114 = por %p112, %p113
      %p116 = scmp.ne.s32.totalorder %s99, %s115
      %p117 = scmp.eq.s32.totalorder %s23, 0
      %p118 = por %p116, %p117
      %p119 = scmp.le.s32.totalorder 1, %s17
      %p120 = scmp.lt.s32.totalorder %s17, 3
      %p121 = pnand %p119, %p120
      %p122 = pneg %p121
      // Predicated region
      $region9: #{tpu_custom_call.1} parent=5 // pred_check
        _
      $region10: #{tpu_custom_call.1} parent=5 // pred_check_branch
        %124 = sbr.rel (%p121) target = $region12
      $region11: #{tpu_custom_call.1} parent=5 // pred_region
        %s125 = ssub.s32 %s17, 1
      $region12: #{tpu_custom_call.1} parent=5 // pred_fallthru
        _
      %p126 = scmp.lt.s32.totalorder %s17, 2
      // Predicated region
      $region13: #{tpu_custom_call.1} parent=5 // pred_check
        %p127 = pneg %p126
      $region14: #{tpu_custom_call.1} parent=5 // pred_check_branch
        %129 = sbr.rel (%p127) target = $region16
      $region15: #{tpu_custom_call.1} parent=5 // pred_region
        // Predicated region
        $region17: #{tpu_custom_call.1} parent=15 // pred_check
          %p130 = pneg %p51
        $region18: #{tpu_custom_call.1} parent=15 // pred_check_branch
          %132 = sbr.rel (%p130) target = $region20
        $region19: #{tpu_custom_call.1} parent=15 // pred_region
          %s133 = sand.u32 %s41, 1
          %s134 = scalar_lea.sflag [#allocation3], %s133
          %s135 = sand.u32 %s41, 1
          %s136 = smul.addr %s135, 8
          %s137 = scalar_lea.vmem [#allocation2], %s136
          %s138 = sadd.s32 %s24, %s25
          %s140 = ssub.s32 128, 128
          %141 = vsyncadd %s134, %s140
          %s142 = smul.addr %s138, 128
          %s143 = scalar_lea.hbm %s0, %s142
          %s145 = sshll.u32 %s137, 4
          %s146 = int_to_ptr.vmem [resolvable:$true] %s145
          %148 = dma.hbm_to_vmem [thread:$0]  %s143, 128, %s146, %s134
        $region20: #{tpu_custom_call.1} parent=15 // pred_fallthru
          _
        // Predicated region
        $region21: #{tpu_custom_call.1} parent=15 // pred_check
          %p149 = pneg %p79
        $region22: #{tpu_custom_call.1} parent=15 // pred_check_branch
          %151 = sbr.rel (%p149) target = $region24
        $region23: #{tpu_custom_call.1} parent=15 // pred_region
          %s152 = sand.u32 %s69, 1
          %s153 = scalar_lea.sflag [#allocation6], %s152
          %s154 = sand.u32 %s69, 1
          %s155 = smul.addr %s154, 8
          %s156 = scalar_lea.vmem [#allocation5], %s155
          %s157 = sadd.s32 %s24, %s25
          %s159 = ssub.s32 128, 128
          %160 = vsyncadd %s153, %s159
          %s161 = smul.addr %s157, 128
          %s162 = scalar_lea.hbm %s1, %s161
          %s164 = sshll.u32 %s156, 4
          %s165 = int_to_ptr.vmem [resolvable:$true] %s164
          %167 = dma.hbm_to_vmem [thread:$0]  %s162, 128, %s165, %s153
        $region24: #{tpu_custom_call.1} parent=15 // pred_fallthru
          _
      $region16: #{tpu_custom_call.1} parent=5 // pred_fallthru
        _
      %p168 = scmp.le.s32.totalorder 1, %s17
      %p169 = scmp.lt.s32.totalorder %s17, 3
      %p170 = pnand %p168, %p169
      %p171 = pneg %p170
      // Predicated region
      $region25: #{tpu_custom_call.1} parent=5 // pred_check
        _
      $region26: #{tpu_custom_call.1} parent=5 // pred_check_branch
        %173 = sbr.rel (%p170) target = $region28
      $region27: #{tpu_custom_call.1} parent=5 // pred_region
        %s174 = ssub.s32 %s17, 1
        %s175 = sand.u32 %s44, 1
        %s176 = scalar_lea.sflag [#allocation3], %s175
        %s177 = sand.u32 %s44, 1
        %s178 = smul.addr %s177, 8
        %s179 = scalar_lea.vmem [#allocation2], %s178
        // Predicated region
        $region29: #{tpu_custom_call.1} parent=27 // pred_check
          %p180 = pneg %p57
        $region30: #{tpu_custom_call.1} parent=27 // pred_check_branch
          %182 = sbr.rel (%p180) target = $region32
        $region31: #{tpu_custom_call.1} parent=27 // pred_region
          %183 = dma.done %s176, 128
        $region32: #{tpu_custom_call.1} parent=27 // pred_fallthru
          _
        %s184 = sand.u32 %s72, 1
        %s185 = scalar_lea.sflag [#allocation6], %s184
        %s186 = sand.u32 %s72, 1
        %s187 = smul.addr %s186, 8
        %s188 = scalar_lea.vmem [#allocation5], %s187
        // Predicated region
        $region33: #{tpu_custom_call.1} parent=27 // pred_check
          %p189 = pneg %p85
        $region34: #{tpu_custom_call.1} parent=27 // pred_check_branch
          %191 = sbr.rel (%p189) target = $region36
        $region35: #{tpu_custom_call.1} parent=27 // pred_region
          %192 = dma.done %s185, 128
        $region36: #{tpu_custom_call.1} parent=27 // pred_fallthru
          _
        %s193 = sand.u32 %s44, 1
        %s194 = scalar_lea.sflag [#allocation3], %s193
        %s195 = sand.u32 %s44, 1
        %s196 = smul.addr %s195, 8
        %s197 = scalar_lea.vmem [#allocation2], %s196
        %p198 = pneg %p57
        %p199 = pneg %p54
        %s200 = sand.u32 %s72, 1
        %s201 = scalar_lea.sflag [#allocation6], %s200
        %s202 = sand.u32 %s72, 1
        %s203 = smul.addr %s202, 8
        %s204 = scalar_lea.vmem [#allocation5], %s203
        %p205 = pneg %p85
        %p206 = pneg %p82
        %p207 = pneg %p111
        %p208 = pneg %p108
        %s209 = sand.u32 %s98, 1
        %s210 = scalar_lea.sflag [#allocation4], %s209
        %s211 = sand.u32 %s98, 1
        %s212 = smul.addr %s211, 8
        %s213 = scalar_lea.vmem [#allocation7], %s212
        %s214 = sadd.s32 %s26, %s27
        %s215 = sadd.s32 %s26, %s27
        %p216 = scmp.eq.s32.totalorder %s27, 0
        // Predicated region
        $region37: #{tpu_custom_call.1} parent=27 // pred_check
          %p217 = pneg %p216
        $region38: #{tpu_custom_call.1} parent=27 // pred_check_branch
          %219 = sbr.rel (%p217) target = $region40
        $region39: #{tpu_custom_call.1} parent=27 // pred_region
          %220 = vst [vmem:[%s213] sm:$0xff] 0.0
        $region40: #{tpu_custom_call.1} parent=27 // pred_fallthru
          _
        %v221 = vld [vmem:[%s179] sm:$0xff]
        %v222 = vld [vmem:[%s188] sm:$0xff]
        %v223 = vadd.f32 %v222, 1.0
        %v224 = vmul.f32 %v221, %v221
        %v225 = vsub.f32 %v223, %v224
        %v226 = vmul.f32 %v222, 1.442695
        %v227 = vpow.pop %v226
        %v228 = vsub.f32 %v225, %v227
        %v229 = vld [vmem:[%s213] sm:$0xff]
        %v230 = vadd.f32 %v228, 0.0
        %v231 = vadd.f32 %v229, %v230
        %232 = vst [vmem:[%s213] sm:$0xff] %v231
        // Predicated region
        $region41: #{tpu_custom_call.1} parent=27 // pred_check
          %p233 = pneg %p216
        $region42: #{tpu_custom_call.1} parent=27 // pred_check_branch
          %235 = sbr.rel (%p233) target = $region44
        $region43: #{tpu_custom_call.1} parent=27 // pred_region
          %v236 = vld [vmem:[%s213] sm:$0xff]
          %v237 = vmul.f32 %v236, -0.03125
          %238 = vst [vmem:[%s213] sm:$0xff] %v237
        $region44: #{tpu_custom_call.1} parent=27 // pred_fallthru
          _
        %s239 = sand.u32 %s98, 1
        %s240 = scalar_lea.sflag [#allocation4], %s239
        %s241 = sand.u32 %s98, 1
        %s242 = smul.addr %s241, 8
        %s243 = scalar_lea.vmem [#allocation7], %s242
        // Predicated region
        $region45: #{tpu_custom_call.1} parent=27 // pred_check
          %p244 = pneg %p108
        $region46: #{tpu_custom_call.1} parent=27 // pred_check_branch
          %246 = sbr.rel (%p244) target = $region48
        $region47: #{tpu_custom_call.1} parent=27 // pred_region
          %s248 = ssub.s32 128, 128
          %249 = vsyncadd %s240, %s248
          %s250 = smul.addr %s26, 128
          %s251 = scalar_lea.hbm %s2, %s250
          %s253 = sshll.u32 %s243, 4
          %s254 = int_to_ptr.vmem [resolvable:$true] %s253
          %256 = dma.vmem_to_hbm [thread:$0]  %s254, 128, %s251, %s240
        $region48: #{tpu_custom_call.1} parent=27 // pred_fallthru
          _
      $region28: #{tpu_custom_call.1} parent=5 // pred_fallthru
        _
      %p257 = scmp.le.s32.totalorder 2, %s17
      // Predicated region
      $region49: #{tpu_custom_call.1} parent=5 // pred_check
        %p258 = pneg %p257
      $region50: #{tpu_custom_call.1} parent=5 // pred_check_branch
        %260 = sbr.rel (%p258) target = $region52
      $region51: #{tpu_custom_call.1} parent=5 // pred_region
        %s261 = ssub.s32 %s17, 2
        // Predicated region
        $region53: #{tpu_custom_call.1} parent=51 // pred_check
          %p262 = pneg %p114
        $region54: #{tpu_custom_call.1} parent=51 // pred_check_branch
          %264 = sbr.rel (%p262) target = $region56
        $region55: #{tpu_custom_call.1} parent=51 // pred_region
          %s265 = sand.u32 %s99, 1
          %s266 = scalar_lea.sflag [#allocation4], %s265
          %s267 = sand.u32 %s99, 1
          %s268 = smul.addr %s267, 8
          %s269 = scalar_lea.vmem [#allocation7], %s268
          %270 = dma.done %s266, 128
        $region56: #{tpu_custom_call.1} parent=51 // pred_fallthru
          _
      $region52: #{tpu_custom_call.1} parent=5 // pred_fallthru
        _
    $region6: #{tpu_custom_call.1} parent=1 // loop_footer
      %s21 = sadd.s32 1, %s17
    $region7: #{tpu_custom_call.1} parent=1 // loop_footer_branch
      %16 = sbr.rel target = $region3
    $region8: #{tpu_custom_call.1} parent=1 // loop_exit
      _
    %271 = vsyncpa [#allocation3], 1
    %s272 = scalar_lea.sflag [#allocation3], 1
    %273 = vsyncpa %s272, 1
    %274 = vsyncpa [#allocation6], 1
    %s275 = scalar_lea.sflag [#allocation6], 1
    %276 = vsyncpa %s275, 1
    %277 = vsyncpa [#allocation4], 1
    %s278 = scalar_lea.sflag [#allocation4], 1
    %279 = vsyncpa %s278, 1

</llo_original>
